<compile_context>
chip_gen: v7x
topology: tpu7x:2x2x1
jax: 0.10.0
libtpu: 0.0.40
codegen_flags: <defaults>
</compile_context>

<pallas_src>
import math

import jax
import jax.numpy as jnp
import numpy as np
from jax.experimental import pallas as pl
from jax.experimental.pallas import tpu as pltpu


def _token_learner_kernel(x_ref, pos_ref, wvs_ref, bvs_ref, expand_ref,
                          wfbd_ref, bft_ref, out_ref):
    Bn, P, E = x_ref.shape
    HT, TE = expand_ref.shape
    T = TE // E

    # Key/value source: x + positional encoding (broadcast over the Bn rows).
    xk = (x_ref[...].astype(jnp.float32)
          + pos_ref[...].astype(jnp.float32)[None]).reshape(Bn * P, E)

    # One stationary matmul produces V and all per-head scores together:
    #   r[:, :E]            = xk @ Wv^T + bv
    #   r[:, E + h*T + t]   = (q_h[t] / sqrt(hd)) . k_h[np]
    r = jnp.dot(xk, wvs_ref[...], preferred_element_type=jnp.float32) + bvs_ref[...]
    v = r[:, :E]                                   # (Bn*P, E)
    s = r[:, E:]                                   # (Bn*P, H*T)

    # Softmax over the P points (exact division — fixes the tolerance failure).
    s3 = s.reshape(Bn, P, HT)
    m = jnp.max(s3, axis=1, keepdims=True)
    ex = jnp.exp(s3 - m)
    l = jnp.sum(ex, axis=1, keepdims=True)
    p = (ex / l).reshape(Bn * P, HT)

    # Expand probabilities to the (t, e) lane layout with a stationary 0/1 matmul:
    #   pe[np, t*E + e] = p[np, head(e)*T + t]
    pe = jnp.dot(p, expand_ref[...], preferred_element_type=jnp.float32)   # (Bn*P, T*E)
    vt = jnp.concatenate([v] * T, axis=-1)                                 # (Bn*P, T*E)

    # Attention * V on the VPU: elementwise product, then reduce over P.
    o = jnp.sum((pe * vt).reshape(Bn, P, TE), axis=1)                      # (Bn, T*E)

    # Fused out_proj . linear as a block-diagonal stationary matmul; the result is
    # already the lane-dense (Bn, T*O) output block.
    y = jnp.dot(o, wfbd_ref[...], preferred_element_type=jnp.float32) + bft_ref[...]
    out_ref[...] = y.astype(out_ref.dtype)


def _round_up(a, m):
    return ((a + m - 1) // m) * m


def token_learner_attention(x, params, *, num_heads=2, block_n=128):
    """x: (B, S, P, E) -> (B, S, T, O)."""
    B, S, P, E = x.shape
    N = B * S
    T = params["token_embed"].shape[0]
    O = params["linear_w"].shape[0]
    assert E % num_heads == 0
    hd = E // num_heads
    HT = num_heads * T
    f32 = jnp.float32

    # ----- host-side parameter prep (layout + fusion, done once) -----
    wq, wk, wv = jnp.split(params["in_proj_w"].astype(f32), 3, axis=0)
    bq, bk, bv = jnp.split(params["in_proj_b"].astype(f32), 3, axis=0)

    # Q projection depends only on parameters -> fully hoisted, scale folded in.
    q = (params["token_embed"].astype(f32) @ wq.T + bq) / math.sqrt(hd)    # (T, E)

    # Per-head masked query matrix (HT, E); row h*T + t holds q[t] restricted to
    # head h's columns.  Folding Wk^T into it yields a stationary score weight.
    qm = jnp.zeros((HT, E), f32)
    for h in range(num_heads):
        qm = qm.at[h * T:(h + 1) * T, h * hd:(h + 1) * hd].set(q[:, h * hd:(h + 1) * hd])
    w_score = wk.T @ qm.T                                                  # (E, HT)
    b_score = qm @ bk                                                      # (HT,)

    # Fused V-projection + score weight: xk @ wvs + bvs -> [ V | scores ].
    wvs = jnp.concatenate([wv.T, w_score], axis=1)                         # (E, E+HT)
    bvs = jnp.concatenate([bv, b_score]).reshape(1, E + HT)

    # Stationary 0/1 expansion matrix: expand[h*T + t, t*E + h*hd + d] = 1.
    expand = jnp.zeros((HT, T * E), f32)
    for h in range(num_heads):
        for t in range(T):
            expand = expand.at[h * T + t, t * E + h * hd:t * E + (h + 1) * hd].set(1.0)

    # Fuse out_proj with the final Linear, then block-diagonalize over the T tokens
    # so the epilogue is one stationary (T*E, T*O) matmul with a lane-dense output.
    wo = params["out_proj_w"].astype(f32); bo = params["out_proj_b"].astype(f32)
    wl = params["linear_w"].astype(f32);  bl = params["linear_b"].astype(f32)
    wf = wo.T @ wl.T                                                       # (E, O)
    bf = bo @ wl.T + bl                                                    # (O,)
    wfbd = jnp.zeros((T * E, T * O), f32)
    for t in range(T):
        wfbd = wfbd.at[t * E:(t + 1) * E, t * O:(t + 1) * O].set(wf)
    bft = jnp.tile(bf, (T,)).reshape(1, T * O)

    # ----- N-blocking: Bn multiple of 8; >= 2 grid steps when N >= 16 (megacore) -----
    n8 = _round_up(N, 8)
    bn = min(_round_up(min(block_n, n8), 8), n8)
    if n8 >= 16:
        bn = min(bn, _round_up(-(-n8 // 2), 8))
    n_pad = _round_up(n8, bn)

    x_flat = x.reshape(N, P, E)
    if n_pad != N:
        x_flat = jnp.pad(x_flat, ((0, n_pad - N), (0, 0), (0, 0)))

    out = pl.pallas_call(
        _token_learner_kernel,
        out_shape=jax.ShapeDtypeStruct((n_pad, T * O), x.dtype),
        grid_spec=pltpu.PrefetchScalarGridSpec(
            num_scalar_prefetch=0,
            grid=(n_pad // bn,),
            in_specs=[
                pl.BlockSpec((bn, P, E), lambda n: (n, 0, 0)),        # x (streamed)
                pl.BlockSpec((P, E), lambda n: (0, 0)),               # positional enc
                pl.BlockSpec((E, E + HT), lambda n: (0, 0)),          # fused V + score W
                pl.BlockSpec((1, E + HT), lambda n: (0, 0)),          # fused V + score b
                pl.BlockSpec((HT, T * E), lambda n: (0, 0)),          # prob expansion
                pl.BlockSpec((T * E, T * O), lambda n: (0, 0)),       # block-diag epilogue W
                pl.BlockSpec((1, T * O), lambda n: (0, 0)),           # fused epilogue bias
            ],
            out_specs=pl.BlockSpec((bn, T * O), lambda n: (n, 0)),
        ),
        compiler_params=pltpu.CompilerParams(
            dimension_semantics=("parallel",),
            vmem_limit_bytes=48 * 1024 * 1024,
        ),
    )(x_flat, params["pos"].astype(f32), wvs, bvs, expand, wfbd, bft)

    return out[:N].reshape(B, S, T, O)


def token_learner_reference(x, params, *, num_heads=2):
    """Pure-JAX reference mirroring PyTorch nn.MultiheadAttention semantics."""
    B, S, P, E = x.shape
    N = B * S
    T = params["token_embed"].shape[0]
    xk = x.reshape(N, P, E) + params["pos"][None]
    tok = params["token_embed"]
    wq, wk, wv = jnp.split(params["in_proj_w"], 3, axis=0)
    bq, bk, bv = jnp.split(params["in_proj_b"], 3, axis=0)
    hd = E // num_heads
    q = (tok @ wq.T + bq).reshape(T, num_heads, hd)
    k = (xk @ wk.T + bk).reshape(N, P, num_heads, hd)
    v = (xk @ wv.T + bv).reshape(N, P, num_heads, hd)
    s = jnp.einsum("thd,nphd->nhtp", q, k) / jnp.sqrt(hd)
    p = jax.nn.softmax(s, axis=-1)
    o = jnp.einsum("nhtp,nphd->nthd", p, v).reshape(N, T, E)
    o = o @ params["out_proj_w"].T + params["out_proj_b"]
    y = o @ params["linear_w"].T + params["linear_b"]
    return y.reshape(B, S, T, -1)


def make_params(key, *, input_dim, num_points, num_tokens, output_dim):
    ks = jax.random.split(key, 8)
    std = 0.1
    return {
        "pos": jax.random.normal(ks[0], (num_points, input_dim), jnp.float32),
        "token_embed": jax.random.normal(ks[1], (num_tokens, input_dim), jnp.float32),
        "in_proj_w": std * jax.random.normal(ks[2], (3 * input_dim, input_dim), jnp.float32),
        "in_proj_b": std * jax.random.normal(ks[3], (3 * input_dim,), jnp.float32),
        "out_proj_w": std * jax.random.normal(ks[4], (input_dim, input_dim), jnp.float32),
        "out_proj_b": std * jax.random.normal(ks[5], (input_dim,), jnp.float32),
        "linear_w": std * jax.random.normal(ks[6], (output_dim, input_dim), jnp.float32),
        "linear_b": std * jax.random.normal(ks[7], (output_dim,), jnp.float32),
    }


if __name__ == "__main__":
    P = 16                      # num_points
    E = 32                      # input_dim
    T = 8                       # num_tokens
    O = 32                      # output_dim
    H = 2                       # num_heads

    key = jax.random.PRNGKey(0)
    kx, kp = jax.random.split(key)
    params = make_params(kp, input_dim=E, num_points=P, num_tokens=T, output_dim=O)

    # Case 1: B*S = 8 -> single block.
    x = jax.random.normal(kx, (2, 4, P, E), jnp.float32)
    ref = token_learner_reference(x, params, num_heads=H)
    out = jax.block_until_ready(token_learner_attention(x, params, num_heads=H))
    np.testing.assert_allclose(np.asarray(out), np.asarray(ref), rtol=1e-4, atol=1e-4)

    # Case 2: B*S = 9 -> padded to 16, two "parallel" grid steps.
    x2 = jax.random.normal(jax.random.PRNGKey(1), (3, 3, P, E), jnp.float32)
    ref2 = token_learner_reference(x2, params, num_heads=H)
    out2 = jax.block_until_ready(token_learner_attention(x2, params, num_heads=H, block_n=8))
    np.testing.assert_allclose(np.asarray(out2), np.asarray(ref2), rtol=1e-4, atol=1e-4)

    print("KERNEL_OK")
</pallas_src>

<mosaic_0001>
module attributes {stable_mosaic.version = 11 : i64} {
  func.func @_token_learner_kernel(%arg0: i32, %arg1: memref<8x16x32xf32, #tpu.memory_space<vmem>>, %arg2: memref<16x32xf32, #tpu.memory_space<vmem>>, %arg3: memref<32x48xf32, #tpu.memory_space<vmem>>, %arg4: memref<1x48xf32, #tpu.memory_space<vmem>>, %arg5: memref<16x256xf32, #tpu.memory_space<vmem>>, %arg6: memref<256x256xf32, #tpu.memory_space<vmem>>, %arg7: memref<1x256xf32, #tpu.memory_space<vmem>>, %arg8: memref<8x256xf32, #tpu.memory_space<vmem>>) attributes {dimension_semantics = [#tpu.dimension_semantics<parallel>], iteration_bounds = array<i64: 1>, scalar_prefetch = 0 : i64, scratch_operands = 0 : i64, tpu.core_type = #tpu.core_type<tc>, window_params = [{transform_indices = @transform_0, window_bounds = array<i64: 8, 16, 32>}, {pipeline_mode = #tpu.pipeline_mode<synchronous>, transform_indices = @transform_1, window_bounds = array<i64: 16, 32>}, {pipeline_mode = #tpu.pipeline_mode<synchronous>, transform_indices = @transform_2, window_bounds = array<i64: 32, 48>}, {pipeline_mode = #tpu.pipeline_mode<synchronous>, transform_indices = @transform_3, window_bounds = array<i64: 1, 48>}, {pipeline_mode = #tpu.pipeline_mode<synchronous>, transform_indices = @transform_4, window_bounds = array<i64: 16, 256>}, {pipeline_mode = #tpu.pipeline_mode<synchronous>, transform_indices = @transform_5, window_bounds = array<i64: 256, 256>}, {pipeline_mode = #tpu.pipeline_mode<synchronous>, transform_indices = @transform_6, window_bounds = array<i64: 1, 256>}, {transform_indices = @transform_7, window_bounds = array<i64: 8, 256>}]} {
    %c0 = arith.constant 0 : index
    %c0_0 = arith.constant 0 : index
    %c0_1 = arith.constant 0 : index
    %0 = vector.load %arg1[%c0, %c0_0, %c0_1] : memref<8x16x32xf32, #tpu.memory_space<vmem>>, vector<8x16x32xf32>
    %c0_2 = arith.constant 0 : index
    %c0_3 = arith.constant 0 : index
    %1 = vector.load %arg2[%c0_2, %c0_3] : memref<16x32xf32, #tpu.memory_space<vmem>>, vector<16x32xf32>
    %2 = vector.shape_cast %1 : vector<16x32xf32> to vector<1x16x32xf32>
    %3 = vector.broadcast %2 : vector<1x16x32xf32> to vector<8x16x32xf32>
    %4 = arith.addf %0, %3 : vector<8x16x32xf32>
    %5 = vector.shape_cast %4 : vector<8x16x32xf32> to vector<128x32xf32>
    %c0_4 = arith.constant 0 : index
    %c0_5 = arith.constant 0 : index
    %6 = vector.load %arg3[%c0_4, %c0_5] : memref<32x48xf32, #tpu.memory_space<vmem>>, vector<32x48xf32>
    %cst = arith.constant dense<0.000000e+00> : vector<128x48xf32>
    %7 = tpu.matmul %5, %6, %cst {dimension_numbers = #tpu.dot_dimension_numbers<[1], [0], [0], [1], [0, 0, 1, 1], [], []>} : vector<128x32xf32>, vector<32x48xf32>, vector<128x48xf32> -> vector<128x48xf32>
    %c0_6 = arith.constant 0 : index
    %c0_7 = arith.constant 0 : index
    %8 = vector.load %arg4[%c0_6, %c0_7] : memref<1x48xf32, #tpu.memory_space<vmem>>, vector<1x48xf32>
    %9 = vector.broadcast %8 : vector<1x48xf32> to vector<128x48xf32>
    %10 = arith.addf %7, %9 : vector<128x48xf32>
    %11 = vector.extract_strided_slice %10 {offsets = [0, 0], sizes = [128, 32], strides = [1, 1]} : vector<128x48xf32> to vector<128x32xf32>
    %12 = vector.extract_strided_slice %10 {offsets = [0, 32], sizes = [128, 16], strides = [1, 1]} : vector<128x48xf32> to vector<128x16xf32>
    %13 = vector.shape_cast %12 : vector<128x16xf32> to vector<8x16x16xf32>
    %cst_8 = arith.constant dense<0xFF800000> : vector<8x16xf32>
    %14 = vector.multi_reduction <maximumf>, %13, %cst_8 [1] : vector<8x16x16xf32> to vector<8x16xf32>
    %15 = vector.shape_cast %14 : vector<8x16xf32> to vector<8x1x16xf32>
    %16 = vector.broadcast %15 : vector<8x1x16xf32> to vector<8x16x16xf32>
    %17 = arith.subf %13, %16 : vector<8x16x16xf32>
    %18 = math.exp %17 : vector<8x16x16xf32>
    %cst_9 = arith.constant dense<0.000000e+00> : vector<8x16xf32>
    %19 = vector.multi_reduction <add>, %18, %cst_9 [1] : vector<8x16x16xf32> to vector<8x16xf32>
    %20 = vector.shape_cast %19 : vector<8x16xf32> to vector<8x1x16xf32>
    %21 = vector.broadcast %20 : vector<8x1x16xf32> to vector<8x16x16xf32>
    %22 = arith.divf %18, %21 : vector<8x16x16xf32>
    %23 = vector.shape_cast %22 : vector<8x16x16xf32> to vector<128x16xf32>
    %c0_10 = arith.constant 0 : index
    %c0_11 = arith.constant 0 : index
    %24 = vector.load %arg5[%c0_10, %c0_11] : memref<16x256xf32, #tpu.memory_space<vmem>>, vector<16x256xf32>
    %cst_12 = arith.constant dense<0.000000e+00> : vector<128x256xf32>
    %25 = tpu.matmul %23, %24, %cst_12 {dimension_numbers = #tpu.dot_dimension_numbers<[1], [0], [0], [1], [0, 0, 1, 1], [], []>} : vector<128x16xf32>, vector<16x256xf32>, vector<128x256xf32> -> vector<128x256xf32>
    %26 = tpu.concatenate %11, %11, %11, %11, %11, %11, %11, %11 in 1 : vector<128x32xf32>, vector<128x32xf32>, vector<128x32xf32>, vector<128x32xf32>, vector<128x32xf32>, vector<128x32xf32>, vector<128x32xf32>, vector<128x32xf32> -> vector<128x256xf32>
    %27 = arith.mulf %25, %26 : vector<128x256xf32>
    %28 = vector.shape_cast %27 : vector<128x256xf32> to vector<8x16x256xf32>
    %cst_13 = arith.constant dense<0.000000e+00> : vector<8x256xf32>
    %29 = vector.multi_reduction <add>, %28, %cst_13 [1] : vector<8x16x256xf32> to vector<8x256xf32>
    %c0_14 = arith.constant 0 : index
    %c0_15 = arith.constant 0 : index
    %30 = vector.load %arg6[%c0_14, %c0_15] : memref<256x256xf32, #tpu.memory_space<vmem>>, vector<256x256xf32>
    %cst_16 = arith.constant dense<0.000000e+00> : vector<8x256xf32>
    %31 = tpu.matmul %29, %30, %cst_16 {dimension_numbers = #tpu.dot_dimension_numbers<[1], [0], [0], [1], [0, 0, 1, 1], [], []>} : vector<8x256xf32>, vector<256x256xf32>, vector<8x256xf32> -> vector<8x256xf32>
    %c0_17 = arith.constant 0 : index
    %c0_18 = arith.constant 0 : index
    %32 = vector.load %arg7[%c0_17, %c0_18] : memref<1x256xf32, #tpu.memory_space<vmem>>, vector<1x256xf32>
    %33 = vector.broadcast %32 : vector<1x256xf32> to vector<8x256xf32>
    %34 = arith.addf %31, %33 : vector<8x256xf32>
    %c0_19 = arith.constant 0 : index
    %c0_20 = arith.constant 0 : index
    %35 = vector.load %arg8[%c0_19, %c0_20] : memref<8x256xf32, #tpu.memory_space<vmem>>, vector<8x256xf32>
    tpu.vector_store %arg8[%c0_19, %c0_20], %34 {strides = array<i32>} : memref<8x256xf32, #tpu.memory_space<vmem>>, vector<8x256xf32>,
    return
  }
  func.func @transform_0(%arg0: i32) -> (i32, i32, i32) {
    %c0_i32 = arith.constant 0 : i32
    %c0_i32_0 = arith.constant 0 : i32
    %c0_i32_1 = arith.constant 0 : i32
    return %arg0, %c0_i32, %c0_i32_0 : i32, i32, i32
  }
  func.func @transform_1(%arg0: i32) -> (i32, i32) {
    %c0_i32 = arith.constant 0 : i32
    %c0_i32_0 = arith.constant 0 : i32
    %c0_i32_1 = arith.constant 0 : i32
    return %c0_i32, %c0_i32_0 : i32, i32
  }
  func.func @transform_2(%arg0: i32) -> (i32, i32) {
    %c0_i32 = arith.constant 0 : i32
    %c0_i32_0 = arith.constant 0 : i32
    %c0_i32_1 = arith.constant 0 : i32
    return %c0_i32, %c0_i32_0 : i32, i32
  }
  func.func @transform_3(%arg0: i32) -> (i32, i32) {
    %c0_i32 = arith.constant 0 : i32
    %c0_i32_0 = arith.constant 0 : i32
    %c0_i32_1 = arith.constant 0 : i32
    return %c0_i32, %c0_i32_0 : i32, i32
  }
  func.func @transform_4(%arg0: i32) -> (i32, i32) {
    %c0_i32 = arith.constant 0 : i32
    %c0_i32_0 = arith.constant 0 : i32
    %c0_i32_1 = arith.constant 0 : i32
    return %c0_i32, %c0_i32_0 : i32, i32
  }
  func.func @transform_5(%arg0: i32) -> (i32, i32) {
    %c0_i32 = arith.constant 0 : i32
    %c0_i32_0 = arith.constant 0 : i32
    %c0_i32_1 = arith.constant 0 : i32
    return %c0_i32, %c0_i32_0 : i32, i32
  }
  func.func @transform_6(%arg0: i32) -> (i32, i32) {
    %c0_i32 = arith.constant 0 : i32
    %c0_i32_0 = arith.constant 0 : i32
    %c0_i32_1 = arith.constant 0 : i32
    return %c0_i32, %c0_i32_0 : i32, i32
  }
  func.func @transform_7(%arg0: i32) -> (i32, i32) {
    %c0_i32 = arith.constant 0 : i32
    %c0_i32_0 = arith.constant 0 : i32
    return %arg0, %c0_i32 : i32, i32
  }
}

</mosaic_0001>

<llo_original>
// kernel: tpu_custom_call.1
$region0: #{tpu_custom_call.1}
  #allocation0 [shape = 'u32[]', space=smem, size = 0x4, offset = 0x4, fixed_abs, tag = 'smem constant byte address 0x4 - core index']
  #allocation1 [shape = 'u32[144,128]{1,0:T(1,128)}', space=vmem, size = 0x12000, scoped, tag = 'internal scratch']
  %s0 = inlined_call_operand.hbm [shape: f32[8,16,32], index: 0, kind: input, shape index: {}]
  %s1 = inlined_call_operand.hbm [shape: f32[16,32], index: 1, kind: input, shape index: {}]
  %s2 = inlined_call_operand.hbm [shape: f32[32,48], index: 2, kind: input, shape index: {}]
  %s3 = inlined_call_operand.vmem [shape: f32[1,48], index: 3, kind: input, shape index: {}]
  %s4 = inlined_call_operand.hbm [shape: f32[16,256], index: 4, kind: input, shape index: {}]
  %s5 = inlined_call_operand.hbm [shape: f32[256,256], index: 5, kind: input, shape index: {}]
  %s6 = inlined_call_operand.vmem [shape: f32[1,256], index: 6, kind: input, shape index: {}]
  %s7 = inlined_call_operand.hbm [shape: f32[8,256], index: 7, kind: output, shape index: {}]
  %s8 = sld [smem:[#allocation0]]
  $region58: #{tpu_custom_call.1} parent=0
    _
  %s10 = ssub.s32 1, %s8
  %s11 = scalar_select 0, %s10, %s8
  $region1: #{tpu_custom_call.1} parent=0
    #allocation2 [shape = 'u8[65536]{0}', space=vmem, size = 0x10000, scoped, tag = 'input window, operand 0, single buffered']
    #allocation3 [shape = 's32[1]{0}', space=sflag, size = 0x4, scoped, tag = 'scoped memory for tpu_custom_call.1']
    #allocation4 [shape = 's32[1]{0}', space=sflag, size = 0x4, scoped, tag = 'scoped memory for tpu_custom_call.1']
    #allocation5 [shape = 'u8[8192]{0}', space=vmem, size = 0x2000, scoped, tag = 'input window, operand 1, single buffered']
    #allocation6 [shape = 's32[1]{0}', space=sflag, size = 0x4, scoped, tag = 'scoped memory for tpu_custom_call.1']
    #allocation7 [shape = 'u8[16384]{0}', space=vmem, size = 0x4000, scoped, tag = 'input window, operand 2, single buffered']
    #allocation8 [shape = 'u8[16384]{0}', space=vmem, size = 0x4000, scoped, tag = 'input window, operand 4, single buffered']
    #allocation9 [shape = 's32[1]{0}', space=sflag, size = 0x4, scoped, tag = 'scoped memory for tpu_custom_call.1']
    #allocation10 [shape = 'u8[262144]{0}', space=vmem, size = 0x40000, scoped, tag = 'input window, operand 5, single buffered']
    #allocation11 [shape = 'u8[8192]{0}', space=vmem, size = 0x2000, scoped, tag = 'output window, operand 0, single buffered']
    %12 = vsyncpa [#allocation3], 0
    %13 = vsyncpa [#allocation6], 0
    %14 = vsyncpa [#allocation9], 0
    %15 = vsyncpa [#allocation4], 0
    // Predicated region
    $region2: #{tpu_custom_call.1} parent=1 // pred_check
      _
    $region3: #{tpu_custom_call.1} parent=1 // pred_check_branch
      %17 = sbr.rel (0) target = $region5
    $region4: #{tpu_custom_call.1} parent=1 // pred_region
      %s19 = ssub.s32 2048, 2048
      %20 = vsyncadd [#allocation3], %s19
      %s21 = sshll.u32 [#allocation2], 4
      %s22 = int_to_ptr.vmem [resolvable:$true] %s21
      %27 = dma.hbm_to_vmem [thread:$0]  %s0, 2048, %s22, [#allocation3], 128, 128, 8
    $region5: #{tpu_custom_call.1} parent=1 // pred_fallthru
      _
    // Predicated region
    $region6: #{tpu_custom_call.1} parent=1 // pred_check
      _
    $region7: #{tpu_custom_call.1} parent=1 // pred_check_branch
      %29 = sbr.rel (0) target = $region9
    $region8: #{tpu_custom_call.1} parent=1 // pred_region
      %s31 = ssub.s32 256, 256
      %32 = vsyncadd [#allocation6], %s31
      %s33 = sshll.u32 [#allocation5], 4
      %s34 = int_to_ptr.vmem [resolvable:$true] %s33
      %39 = dma.hbm_to_vmem [thread:$0]  %s1, 256, %s34, [#allocation6], 128, 128, 8
    $region9: #{tpu_custom_call.1} parent=1 // pred_fallthru
      _
    // Predicated region
    $region10: #{tpu_custom_call.1} parent=1 // pred_check
      _
    $region11: #{tpu_custom_call.1} parent=1 // pred_check_branch
      %41 = sbr.rel (0) target = $region13
    $region12: #{tpu_custom_call.1} parent=1 // pred_region
      %s43 = ssub.s32 512, 512
      %44 = vsyncadd [#allocation6], %s43
      %s45 = sshll.u32 [#allocation7], 4
      %s46 = int_to_ptr.vmem [resolvable:$true] %s45
      %51 = dma.hbm_to_vmem [thread:$0]  %s2, 512, %s46, [#allocation6], 128, 128, 8
    $region13: #{tpu_custom_call.1} parent=1 // pred_fallthru
      _
    // Predicated region
    $region14: #{tpu_custom_call.1} parent=1 // pred_check
      _
    $region15: #{tpu_custom_call.1} parent=1 // pred_check_branch
      %53 = sbr.rel (0) target = $region17
    $region16: #{tpu_custom_call.1} parent=1 // pred_region
      _
    $region17: #{tpu_custom_call.1} parent=1 // pred_fallthru
      _
    // Predicated region
    $region18: #{tpu_custom_call.1} parent=1 // pred_check
      _
    $region19: #{tpu_custom_call.1} parent=1 // pred_check_branch
      %55 = sbr.rel (0) target = $region21
    $region20: #{tpu_custom_call.1} parent=1 // pred_region
      %s57 = ssub.s32 512, 512
      %58 = vsyncadd [#allocation9], %s57
      %s59 = sshll.u32 [#allocation8], 4
      %s60 = int_to_ptr.vmem [resolvable:$true] %s59
      %65 = dma.hbm_to_vmem [thread:$0]  %s4, 512, %s60, [#allocation9], 256, 256, 16
    $region21: #{tpu_custom_call.1} parent=1 // pred_fallthru
      _
    // Predicated region
    $region22: #{tpu_custom_call.1} parent=1 // pred_check
      _
    $region23: #{tpu_custom_call.1} parent=1 // pred_check_branch
      %67 = sbr.rel (0) target = $region25
    $region24: #{tpu_custom_call.1} parent=1 // pred_region
      %s69 = ssub.s32 8192, 8192
      %70 = vsyncadd [#allocation9], %s69
      %s71 = sshll.u32 [#allocation10], 4
      %s72 = int_to_ptr.vmem [resolvable:$true] %s71
      %77 = dma.hbm_to_vmem [thread:$0]  %s5, 8192, %s72, [#allocation9], 256, 256, 16
    $region25: #{tpu_custom_call.1} parent=1 // pred_fallthru
      _
    // Predicated region
    $region26: #{tpu_custom_call.1} parent=1 // pred_check
      _
    $region27: #{tpu_custom_call.1} parent=1 // pred_check_branch
      %79 = sbr.rel (0) target = $region29
    $region28: #{tpu_custom_call.1} parent=1 // pred_region
      _
    $region29: #{tpu_custom_call.1} parent=1 // pred_fallthru
      _
    // Predicated region
    $region30: #{tpu_custom_call.1} parent=1 // pred_check
      _
    $region31: #{tpu_custom_call.1} parent=1 // pred_check_branch
      %81 = sbr.rel (0) target = $region33
    $region32: #{tpu_custom_call.1} parent=1 // pred_region
      %82 = dma.done [#allocation3], 2048
    $region33: #{tpu_custom_call.1} parent=1 // pred_fallthru
      _
    // Predicated region
    $region34: #{tpu_custom_call.1} parent=1 // pred_check
      _
    $region35: #{tpu_custom_call.1} parent=1 // pred_check_branch
      %84 = sbr.rel (0) target = $region37
    $region36: #{tpu_custom_call.1} parent=1 // pred_region
      %85 = dma.done [#allocation6], 256
    $region37: #{tpu_custom_call.1} parent=1 // pred_fallthru
      _
    // Predicated region
    $region38: #{tpu_custom_call.1} parent=1 // pred_check
      _
    $region39: #{tpu_custom_call.1} parent=1 // pred_check_branch
      %87 = sbr.rel (0) target = $region41
    $region40: #{tpu_custom_call.1} parent=1 // pred_region
      %88 = dma.done [#allocation6], 512
    $region41: #{tpu_custom_call.1} parent=1 // pred_fallthru
      _
    // Predicated region
    $region42: #{tpu_custom_call.1} parent=1 // pred_check
      _
    $region43: #{tpu_custom_call.1} parent=1 // pred_check_branch
      %90 = sbr.rel (0) target = $region45
    $region44: #{tpu_custom_call.1} parent=1 // pred_region
      %91 = dma.done [#allocation9], 512
    $region45: #{tpu_custom_call.1} parent=1 // pred_fallthru
      _
    // Predicated region
    $region46: #{tpu_custom_call.1} parent=1 // pred_check
      _
    $region47: #{tpu_custom_call.1} parent=1 // pred_check_branch
      %93 = sbr.rel (0) target = $region49
    $region48: #{tpu_custom_call.1} parent=1 // pred_region
      %94 = dma.done [#allocation9], 8192
    $region49: #{tpu_custom_call.1} parent=1 // pred_fallthru
      _
    %v95 = vld [vmem:[#allocation2] sm:$0xff]
    %v96 = vld [vmem:[#allocation2 + $0x8] sm:$0xff]
    %v97 = vld [vmem:[#allocation2 + $0x10] sm:$0xff]
    %v98 = vld [vmem:[#allocation2 + $0x18] sm:$0xff]
    %v99 = vld [vmem:[#allocation2 + $0x20] sm:$0xff]
    %v100 = vld [vmem:[#allocation2 + $0x28] sm:$0xff]
    %v101 = vld [vmem:[#allocation2 + $0x30] sm:$0xff]
    %v102 = vld [vmem:[#allocation2 + $0x38] sm:$0xff]
    %v103 = vld [vmem:[#allocation2 + $0x40] sm:$0xff]
    %v104 = vld [vmem:[#allocation2 + $0x48] sm:$0xff]
    %v105 = vld [vmem:[#allocation2 + $0x50] sm:$0xff]
    %v106 = vld [vmem:[#allocation2 + $0x58] sm:$0xff]
    %v107 = vld [vmem:[#allocation2 + $0x60] sm:$0xff]
    %v108 = vld [vmem:[#allocation2 + $0x68] sm:$0xff]
    %v109 = vld [vmem:[#allocation2 + $0x70] sm:$0xff]
    %v110 = vld [vmem:[#allocation2 + $0x78] sm:$0xff]
    %v111 = vld [vmem:[#allocation5] sm:$0xff]
    %v112 = vld [vmem:[#allocation5 + $0x8] sm:$0xff]
    %v113 = vadd.f32 %v95, %v111
    %v114 = vadd.f32 %v96, %v112
    %v115 = vadd.f32 %v97, %v111
    %v116 = vadd.f32 %v98, %v112
    %v117 = vadd.f32 %v99, %v111
    %v118 = vadd.f32 %v100, %v112
    %v119 = vadd.f32 %v101, %v111
    %v120 = vadd.f32 %v102, %v112
    %v121 = vadd.f32 %v103, %v111
    %v122 = vadd.f32 %v104, %v112
    %v123 = vadd.f32 %v105, %v111
    %v124 = vadd.f32 %v106, %v112
    %v125 = vadd.f32 %v107, %v111
    %v126 = vadd.f32 %v108, %v112
    %v127 = vadd.f32 %v109, %v111
    %v128 = vadd.f32 %v110, %v112
    %v129 = vld [vmem:[#allocation7] sm:$0xff]
    %v130 = vld [vmem:[#allocation7 + $0x8] sm:$0xff]
    %v131 = vld [vmem:[#allocation7 + $0x10] sm:$0xff]
    %v132 = vld [vmem:[#allocation7 + $0x18] sm:$0xff]
    %v133 = vld [vmem:[%s3] sm:$0x1]
    %v135 = vlaneseq
    %v136 = vshrl.u32 %v135, 7
    %v137 = vsub.s32 0, %v136
    %v138 = vrot.slane %v133, %v137
    %vm140 = vcmask 261120
    %v142 = vsel %vm140, %v113, 0
    %v145 = vsel %vm140, %v114, 0
    %v148 = vsel %vm140, %v115, 0
    %v151 = vsel %vm140, %v116, 0
    %v154 = vsel %vm140, %v117, 0
    %v157 = vsel %vm140, %v118, 0
    %v160 = vsel %vm140, %v119, 0
    %v163 = vsel %vm140, %v120, 0
    %v166 = vsel %vm140, %v121, 0
    %v169 = vsel %vm140, %v122, 0
    %v172 = vsel %vm140, %v123, 0
    %v175 = vsel %vm140, %v124, 0
    %v178 = vsel %vm140, %v125, 0
    %v181 = vsel %vm140, %v126, 0
    %v184 = vsel %vm140, %v127, 0
    %v187 = vsel %vm140, %v128, 0
    %189 = vmatprep.subr.mxu0 0.0
    %190 = vmatpush1.msra.mxu0 %v129
    %191 = vmatprep.subr.mxu0 0.0
    %192 = vmatpush1.msra.mxu0 %v130
    %193 = vmatprep.subr.mxu0 0.0
    %194 = vmatpush1.msra.mxu0 %v131
    %195 = vmatprep.subr.mxu0 0.0
    %196 = vmatpush1.msra.mxu0 %v132
    %197 = vmatprep.subr.mxu0 0.0
    %198 = vmatpush1.msra.mxu0 0.0
    %199 = vmatprep.subr.mxu0 0.0
    %200 = vmatpush1.msra.mxu0 0.0
    %201 = vmatprep.subr.mxu0 0.0
    %202 = vmatpush1.msra.mxu0 0.0
    %203 = vmatprep.subr.mxu0 0.0
    %204 = vmatpush1.msra.mxu0 0.0
    %205 = vmatprep.subr.mxu0 0.0
    %206 = vmatpush1.msra.mxu0 0.0
    %207 = vmatprep.subr.mxu0 0.0
    %208 = vmatpush1.msra.mxu0 0.0
    %209 = vmatprep.subr.mxu0 0.0
    %210 = vmatpush1.msra.mxu0 0.0
    %211 = vmatprep.subr.mxu0 0.0
    %212 = vmatpush1.msra.mxu0 0.0
    %213 = vmatprep.subr.mxu0 0.0
    %214 = vmatpush1.msra.mxu0 0.0
    %215 = vmatprep.subr.mxu0 0.0
    %216 = vmatpush1.msra.mxu0 0.0
    %217 = vmatprep.subr.mxu0 0.0
    %218 = vmatpush1.msra.mxu0 0.0
    %219 = vmatprep.subr.mxu0 0.0
    %220 = vmatpush1.msra.mxu0 0.0
    %221 = vmatprep.subr.mxu0 0.0
    %222 = vmatpush1.msra.mxu0 0.0
    %223 = vmatprep.subr.mxu0 0.0
    %224 = vmatpush1.msra.mxu0 0.0
    %225 = vmatprep.subr.mxu0 0.0
    %226 = vmatpush1.msra.mxu0 0.0
    %227 = vmatprep.subr.mxu0 0.0
    %228 = vmatpush1.msra.mxu0 0.0
    %229 = vmatprep.subr.mxu0 0.0
    %230 = vmatpush1.msra.mxu0 0.0
    %231 = vmatprep.subr.mxu0 0.0
    %232 = vmatpush1.msra.mxu0 0.0
    %233 = vmatprep.subr.mxu0 0.0
    %234 = vmatpush1.msra.mxu0 0.0
    %235 = vmatprep.subr.mxu0 0.0
    %236 = vmatpush1.msra.mxu0 0.0
    %237 = vmatprep.subr.mxu0 0.0
    %238 = vmatpush1.msra.mxu0 0.0
    %239 = vmatprep.subr.mxu0 0.0
    %240 = vmatpush1.msra.mxu0 0.0
    %241 = vmatprep.subr.mxu0 0.0
    %242 = vmatpush1.msra.mxu0 0.0
    %243 = vmatprep.subr.mxu0 0.0
    %244 = vmatpush1.msra.mxu0 0.0
    %245 = vmatprep.subr.mxu0 0.0
    %246 = vmatpush1.msra.mxu0 0.0
    %247 = vmatprep.subr.mxu0 0.0
    %248 = vmatpush1.msra.mxu0 0.0
    %249 = vmatprep.subr.mxu0 0.0
    %250 = vmatpush1.msra.mxu0 0.0
    %251 = vmatprep.subr.mxu0 0.0
    %252 = vmatpush1.msra.mxu0 0.0
    %253 = vmatprep.mubr.f32.mxu0 0.0
    %254 = vmatmul.mubr.f32.gmra.mrb[0].mxu0 %v142
    %v255 = vpop.f32.mrb[0].mxu0
    %v256 = vadd.f32 %v138, %v255
    %v257 = vpop.f32.mrb[0].mxu0
    %258 = vmatprep.mubr.f32.mxu0 0.0
    %259 = vmatmul.mubr.f32.gmra.mrb[0].mxu0 %v145
    %v260 = vpop.f32.mrb[0].mxu0
    %v261 = vadd.f32 %v138, %v260
    %v262 = vpop.f32.mrb[0].mxu0
    %263 = vmatprep.mubr.f32.mxu0 0.0
    %264 = vmatmul.mubr.f32.gmra.mrb[0].mxu0 %v148
    %v265 = vpop.f32.mrb[0].mxu0
    %v266 = vadd.f32 %v138, %v265
    %v267 = vpop.f32.mrb[0].mxu0
    %268 = vmatprep.mubr.f32.mxu0 0.0
    %269 = vmatmul.mubr.f32.gmra.mrb[0].mxu0 %v151
    %v270 = vpop.f32.mrb[0].mxu0
    %v271 = vadd.f32 %v138, %v270
    %v272 = vpop.f32.mrb[0].mxu0
    %273 = vmatprep.mubr.f32.mxu0 0.0
    %274 = vmatmul.mubr.f32.gmra.mrb[0].mxu0 %v154
    %v275 = vpop.f32.mrb[0].mxu0
    %v276 = vadd.f32 %v138, %v275
    %v277 = vpop.f32.mrb[0].mxu0
    %278 = vmatprep.mubr.f32.mxu0 0.0
    %279 = vmatmul.mubr.f32.gmra.mrb[0].mxu0 %v157
    %v280 = vpop.f32.mrb[0].mxu0
    %v281 = vadd.f32 %v138, %v280
    %v282 = vpop.f32.mrb[0].mxu0
    %283 = vmatprep.mubr.f32.mxu0 0.0
    %284 = vmatmul.mubr.f32.gmra.mrb[0].mxu0 %v160
    %v285 = vpop.f32.mrb[0].mxu0
    %v286 = vadd.f32 %v138, %v285
    %v287 = vpop.f32.mrb[0].mxu0
    %288 = vmatprep.mubr.f32.mxu0 0.0
    %289 = vmatmul.mubr.f32.gmra.mrb[0].mxu0 %v163
    %v290 = vpop.f32.mrb[0].mxu0
    %v291 = vadd.f32 %v138, %v290
    %v292 = vpop.f32.mrb[0].mxu0
    %293 = vmatprep.mubr.f32.mxu0 0.0
    %294 = vmatmul.mubr.f32.gmra.mrb[0].mxu0 %v166
    %v295 = vpop.f32.mrb[0].mxu0
    %v296 = vadd.f32 %v138, %v295
    %v297 = vpop.f32.mrb[0].mxu0
    %298 = vmatprep.mubr.f32.mxu0 0.0
    %299 = vmatmul.mubr.f32.gmra.mrb[0].mxu0 %v169
    %v300 = vpop.f32.mrb[0].mxu0
    %v301 = vadd.f32 %v138, %v300
    %v302 = vpop.f32.mrb[0].mxu0
    %303 = vmatprep.mubr.f32.mxu0 0.0
    %304 = vmatmul.mubr.f32.gmra.mrb[0].mxu0 %v172
    %v305 = vpop.f32.mrb[0].mxu0
    %v306 = vadd.f32 %v138, %v305
    %v307 = vpop.f32.mrb[0].mxu0
    %308 = vmatprep.mubr.f32.mxu0 0.0
    %309 = vmatmul.mubr.f32.gmra.mrb[0].mxu0 %v175
    %v310 = vpop.f32.mrb[0].mxu0
    %v311 = vadd.f32 %v138, %v310
    %v312 = vpop.f32.mrb[0].mxu0
    %313 = vmatprep.mubr.f32.mxu0 0.0
    %314 = vmatmul.mubr.f32.gmra.mrb[0].mxu0 %v178
    %v315 = vpop.f32.mrb[0].mxu0
    %v316 = vadd.f32 %v138, %v315
    %v317 = vpop.f32.mrb[0].mxu0
    %318 = vmatprep.mubr.f32.mxu0 0.0
    %319 = vmatmul.mubr.f32.gmra.mrb[0].mxu0 %v181
    %v320 = vpop.f32.mrb[0].mxu0
    %v321 = vadd.f32 %v138, %v320
    %v322 = vpop.f32.mrb[0].mxu0
    %323 = vmatprep.mubr.f32.mxu0 0.0
    %324 = vmatmul.mubr.f32.gmra.mrb[0].mxu0 %v184
    %v325 = vpop.f32.mrb[0].mxu0
    %v326 = vadd.f32 %v138, %v325
    %v327 = vpop.f32.mrb[0].mxu0
    %328 = vmatprep.mubr.f32.mxu0 0.0
    %329 = vmatmul.mubr.f32.gmra.mrb[0].mxu0 %v187
    %v330 = vpop.f32.mrb[0].mxu0
    %v331 = vadd.f32 %v138, %v330
    %v332 = vpop.f32.mrb[0].mxu0
    %333 = vdwg.mxu0
    %vm334 = vcmask 392448
    %v335 = vsel %vm334, %v256, -inf
    %v336 = vsel %vm334, %v261, -inf
    %v337 = vmax.f32 %v335, %v336
    %v338 = vrot.slane %v337, 4
    %v339 = vmax.f32 %v337, %v338
    %v340 = vrot.slane %v339, 2
    %v341 = vmax.f32 %v339, %v340
    %v342 = vrot.slane %v341, 1
    %v343 = vmax.f32 %v341, %v342
    %v344 = vsel %vm334, %v266, -inf
    %v345 = vsel %vm334, %v271, -inf
    %v346 = vmax.f32 %v344, %v345
    %v347 = vrot.slane %v346, 4
    %v348 = vmax.f32 %v346, %v347
    %v349 = vrot.slane %v348, 2
    %v350 = vmax.f32 %v348, %v349
    %v351 = vrot.slane %v350, 1
    %v352 = vmax.f32 %v350, %v351
    %v353 = vsel %vm334, %v276, -inf
    %v354 = vsel %vm334, %v281, -inf
    %v355 = vmax.f32 %v353, %v354
    %v356 = vrot.slane %v355, 4
    %v357 = vmax.f32 %v355, %v356
    %v358 = vrot.slane %v357, 2
    %v359 = vmax.f32 %v357, %v358
    %v360 = vrot.slane %v359, 1
    %v361 = vmax.f32 %v359, %v360
    %v362 = vsel %vm334, %v286, -inf
    %v363 = vsel %vm334, %v291, -inf
    %v364 = vmax.f32 %v362, %v363
    %v365 = vrot.slane %v364, 4
    %v366 = vmax.f32 %v364, %v365
    %v367 = vrot.slane %v366, 2
    %v368 = vmax.f32 %v366, %v367
    %v369 = vrot.slane %v368, 1
    %v370 = vmax.f32 %v368, %v369
    %v371 = vsel %vm334, %v296, -inf
    %v372 = vsel %vm334, %v301, -inf
    %v373 = vmax.f32 %v371, %v372
    %v374 = vrot.slane %v373, 4
    %v375 = vmax.f32 %v373, %v374
    %v376 = vrot.slane %v375, 2
    %v377 = vmax.f32 %v375, %v376
    %v378 = vrot.slane %v377, 1
    %v379 = vmax.f32 %v377, %v378
    %v380 = vsel %vm334, %v306, -inf
    %v381 = vsel %vm334, %v311, -inf
    %v382 = vmax.f32 %v380, %v381
    %v383 = vrot.slane %v382, 4
    %v384 = vmax.f32 %v382, %v383
    %v385 = vrot.slane %v384, 2
    %v386 = vmax.f32 %v384, %v385
    %v387 = vrot.slane %v386, 1
    %v388 = vmax.f32 %v386, %v387
    %v389 = vsel %vm334, %v316, -inf
    %v390 = vsel %vm334, %v321, -inf
    %v391 = vmax.f32 %v389, %v390
    %v392 = vrot.slane %v391, 4
    %v393 = vmax.f32 %v391, %v392
    %v394 = vrot.slane %v393, 2
    %v395 = vmax.f32 %v393, %v394
    %v396 = vrot.slane %v395, 1
    %v397 = vmax.f32 %v395, %v396
    %v398 = vsel %vm334, %v326, -inf
    %v399 = vsel %vm334, %v331, -inf
    %v400 = vmax.f32 %v398, %v399
    %v401 = vrot.slane %v400, 4
    %v402 = vmax.f32 %v400, %v401
    %v403 = vrot.slane %v402, 2
    %v404 = vmax.f32 %v402, %v403
    %v405 = vrot.slane %v404, 1
    %v406 = vmax.f32 %v404, %v405
    %v407 = vsub.f32 %v256, %v343
    %v408 = vsub.f32 %v261, %v343
    %v409 = vsub.f32 %v266, %v352
    %v410 = vsub.f32 %v271, %v352
    %v411 = vsub.f32 %v276, %v361
    %v412 = vsub.f32 %v281, %v361
    %v413 = vsub.f32 %v286, %v370
    %v414 = vsub.f32 %v291, %v370
    %v415 = vsub.f32 %v296, %v379
    %v416 = vsub.f32 %v301, %v379
    %v417 = vsub.f32 %v306, %v388
    %v418 = vsub.f32 %v311, %v388
    %v419 = vsub.f32 %v316, %v397
    %v420 = vsub.f32 %v321, %v397
    %v421 = vsub.f32 %v326, %v406
    %v422 = vsub.f32 %v331, %v406
    %v423 = vmul.f32 %v407, 1.442695
    %v424 = vpow.pop %v423
    %v425 = vmul.f32 %v408, 1.442695
    %v426 = vpow.pop %v425
    %v427 = vmul.f32 %v409, 1.442695
    %v428 = vpow.pop %v427
    %v429 = vmul.f32 %v410, 1.442695
    %v430 = vpow.pop %v429
    %v431 = vmul.f32 %v411, 1.442695
    %v432 = vpow.pop %v431
    %v433 = vmul.f32 %v412, 1.442695
    %v434 = vpow.pop %v433
    %v435 = vmul.f32 %v413, 1.442695
    %v436 = vpow.pop %v435
    %v437 = vmul.f32 %v414, 1.442695
    %v438 = vpow.pop %v437
    %v439 = vmul.f32 %v415, 1.442695
    %v440 = vpow.pop %v439
    %v441 = vmul.f32 %v416, 1.442695
    %v442 = vpow.pop %v441
    %v443 = vmul.f32 %v417, 1.442695
    %v444 = vpow.pop %v443
    %v445 = vmul.f32 %v418, 1.442695
    %v446 = vpow.pop %v445
    %v447 = vmul.f32 %v419, 1.442695
    %v448 = vpow.pop %v447
    %v449 = vmul.f32 %v420, 1.442695
    %v450 = vpow.pop %v449
    %v451 = vmul.f32 %v421, 1.442695
    %v452 = vpow.pop %v451
    %v453 = vmul.f32 %v422, 1.442695
    %v454 = vpow.pop %v453
    %v455 = vsel %vm334, %v424, 0.0
    %v456 = vsel %vm334, %v426, 0.0
    %v457 = vadd.f32 %v455, %v456
    %v458 = vrot.slane %v457, 4
    %v459 = vadd.f32 %v457, %v458
    %v460 = vrot.slane %v459, 2
    %v461 = vadd.f32 %v459, %v460
    %v462 = vrot.slane %v461, 1
    %v463 = vadd.f32 %v461, %v462
    %v464 = vsel %vm334, %v428, 0.0
    %v465 = vsel %vm334, %v430, 0.0
    %v466 = vadd.f32 %v464, %v465
    %v467 = vrot.slane %v466, 4
    %v468 = vadd.f32 %v466, %v467
    %v469 = vrot.slane %v468, 2
    %v470 = vadd.f32 %v468, %v469
    %v471 = vrot.slane %v470, 1
    %v472 = vadd.f32 %v470, %v471
    %v473 = vsel %vm334, %v432, 0.0
    %v474 = vsel %vm334, %v434, 0.0
    %v475 = vadd.f32 %v473, %v474
    %v476 = vrot.slane %v475, 4
    %v477 = vadd.f32 %v475, %v476
    %v478 = vrot.slane %v477, 2
    %v479 = vadd.f32 %v477, %v478
    %v480 = vrot.slane %v479, 1
    %v481 = vadd.f32 %v479, %v480
    %v482 = vsel %vm334, %v436, 0.0
    %v483 = vsel %vm334, %v438, 0.0
    %v484 = vadd.f32 %v482, %v483
    %v485 = vrot.slane %v484, 4
    %v486 = vadd.f32 %v484, %v485
    %v487 = vrot.slane %v486, 2
    %v488 = vadd.f32 %v486, %v487
    %v489 = vrot.slane %v488, 1
    %v490 = vadd.f32 %v488, %v489
    %v491 = vsel %vm334, %v440, 0.0
    %v492 = vsel %vm334, %v442, 0.0
    %v493 = vadd.f32 %v491, %v492
    %v494 = vrot.slane %v493, 4
    %v495 = vadd.f32 %v493, %v494
    %v496 = vrot.slane %v495, 2
    %v497 = vadd.f32 %v495, %v496
    %v498 = vrot.slane %v497, 1
    %v499 = vadd.f32 %v497, %v498
    %v500 = vsel %vm334, %v444, 0.0
    %v501 = vsel %vm334, %v446, 0.0
    %v502 = vadd.f32 %v500, %v501
    %v503 = vrot.slane %v502, 4
    %v504 = vadd.f32 %v502, %v503
    %v505 = vrot.slane %v504, 2
    %v506 = vadd.f32 %v504, %v505
    %v507 = vrot.slane %v506, 1
    %v508 = vadd.f32 %v506, %v507
    %v509 = vsel %vm334, %v448, 0.0
    %v510 = vsel %vm334, %v450, 0.0
    %v511 = vadd.f32 %v509, %v510
    %v512 = vrot.slane %v511, 4
    %v513 = vadd.f32 %v511, %v512
    %v514 = vrot.slane %v513, 2
    %v515 = vadd.f32 %v513, %v514
    %v516 = vrot.slane %v515, 1
    %v517 = vadd.f32 %v515, %v516
    %v518 = vsel %vm334, %v452, 0.0
    %v519 = vsel %vm334, %v454, 0.0
    %v520 = vadd.f32 %v518, %v519
    %v521 = vrot.slane %v520, 4
    %v522 = vadd.f32 %v520, %v521
    %v523 = vrot.slane %v522, 2
    %v524 = vadd.f32 %v522, %v523
    %v525 = vrot.slane %v524, 1
    %v526 = vadd.f32 %v524, %v525
    %v527 = vrcp.pop %v463
    %v528 = vmul.f32 %v424, %v527
    %v529 = vmul.f32 %v426, %v527
    %v530 = vrcp.pop %v472
    %v531 = vmul.f32 %v428, %v530
    %v532 = vmul.f32 %v430, %v530
    %v533 = vrcp.pop %v481
    %v534 = vmul.f32 %v432, %v533
    %v535 = vmul.f32 %v434, %v533
    %v536 = vrcp.pop %v490
    %v537 = vmul.f32 %v436, %v536
    %v538 = vmul.f32 %v438, %v536
    %v539 = vrcp.pop %v499
    %v540 = vmul.f32 %v440, %v539
    %v541 = vmul.f32 %v442, %v539
    %v542 = vrcp.pop %v508
    %v543 = vmul.f32 %v444, %v542
    %v544 = vmul.f32 %v446, %v542
    %v545 = vrcp.pop %v517
    %v546 = vmul.f32 %v448, %v545
    %v547 = vmul.f32 %v450, %v545
    %v548 = vrcp.pop %v526
    %v549 = vmul.f32 %v452, %v548
    %v550 = vmul.f32 %v454, %v548
    %v551 = vld [vmem:[#allocation8] sm:$0xff]
    %v552 = vld [vmem:[#allocation8 + $0x8] sm:$0xff]
    %v553 = vld [vmem:[#allocation8 + $0x10] sm:$0xff]
    %v554 = vld [vmem:[#allocation8 + $0x18] sm:$0xff]
    %571 = vrot.lane.b32.xlu0 %v528, 96
    %v572 = vpop.permute.xlu0 %571
    %573 = vrot.lane.b32.xlu0 %v529, 96
    %v574 = vpop.permute.xlu0 %573
    %575 = vrot.lane.b32.xlu0 %v531, 96
    %v576 = vpop.permute.xlu0 %575
    %577 = vrot.lane.b32.xlu0 %v532, 96
    %v578 = vpop.permute.xlu0 %577
    %579 = vrot.lane.b32.xlu0 %v534, 96
    %v580 = vpop.permute.xlu0 %579
    %581 = vrot.lane.b32.xlu0 %v535, 96
    %v582 = vpop.permute.xlu0 %581
    %583 = vrot.lane.b32.xlu0 %v537, 96
    %v584 = vpop.permute.xlu0 %583
    %585 = vrot.lane.b32.xlu0 %v538, 96
    %v586 = vpop.permute.xlu0 %585
    %587 = vrot.lane.b32.xlu0 %v540, 96
    %v588 = vpop.permute.xlu0 %587
    %589 = vrot.lane.b32.xlu0 %v541, 96
    %v590 = vpop.permute.xlu0 %589
    %591 = vrot.lane.b32.xlu0 %v543, 96
    %v592 = vpop.permute.xlu0 %591
    %593 = vrot.lane.b32.xlu0 %v544, 96
    %v594 = vpop.permute.xlu0 %593
    %595 = vrot.lane.b32.xlu0 %v546, 96
    %v596 = vpop.permute.xlu0 %595
    %597 = vrot.lane.b32.xlu0 %v547, 96
    %v598 = vpop.permute.xlu0 %597
    %599 = vrot.lane.b32.xlu0 %v549, 96
    %v600 = vpop.permute.xlu0 %599
    %601 = vrot.lane.b32.xlu0 %v550, 96
    %v602 = vpop.permute.xlu0 %601
    %vm603 = vcmask 130048
    %v604 = vsel %vm603, %v572, 0
    %v606 = vsel %vm603, %v574, 0
    %v608 = vsel %vm603, %v576, 0
    %v610 = vsel %vm603, %v578, 0
    %v612 = vsel %vm603, %v580, 0
    %v614 = vsel %vm603, %v582, 0
    %v616 = vsel %vm603, %v584, 0
    %v618 = vsel %vm603, %v586, 0
    %v620 = vsel %vm603, %v588, 0
    %v622 = vsel %vm603, %v590, 0
    %v624 = vsel %vm603, %v592, 0
    %v626 = vsel %vm603, %v594, 0
    %v628 = vsel %vm603, %v596, 0
    %v630 = vsel %vm603, %v598, 0
    %v632 = vsel %vm603, %v600, 0
    %v634 = vsel %vm603, %v602, 0
    %636 = vmatprep.subr.mxu0 %v552
    %637 = vmatpush1.msra.mxu0 %v551
    %638 = vmatprep.subr.mxu0 %v554
    %639 = vmatpush1.msra.mxu0 %v553
    %640 = vmatprep.subr.mxu0 0.0
    %641 = vmatpush1.msra.mxu0 0.0
    %642 = vmatprep.subr.mxu0 0.0
    %643 = vmatpush1.msra.mxu0 0.0
    %644 = vmatprep.subr.mxu0 0.0
    %645 = vmatpush1.msra.mxu0 0.0
    %646 = vmatprep.subr.mxu0 0.0
    %647 = vmatpush1.msra.mxu0 0.0
    %648 = vmatprep.subr.mxu0 0.0
    %649 = vmatpush1.msra.mxu0 0.0
    %650 = vmatprep.subr.mxu0 0.0
    %651 = vmatpush1.msra.mxu0 0.0
    %652 = vmatprep.subr.mxu0 0.0
    %653 = vmatpush1.msra.mxu0 0.0
    %654 = vmatprep.subr.mxu0 0.0
    %655 = vmatpush1.msra.mxu0 0.0
    %656 = vmatprep.subr.mxu0 0.0
    %657 = vmatpush1.msra.mxu0 0.0
    %658 = vmatprep.subr.mxu0 0.0
    %659 = vmatpush1.msra.mxu0 0.0
    %660 = vmatprep.subr.mxu0 0.0
    %661 = vmatpush1.msra.mxu0 0.0
    %662 = vmatprep.subr.mxu0 0.0
    %663 = vmatpush1.msra.mxu0 0.0
    %664 = vmatprep.subr.mxu0 0.0
    %665 = vmatpush1.msra.mxu0 0.0
    %666 = vmatprep.subr.mxu0 0.0
    %667 = vmatpush1.msra.mxu0 0.0
    %668 = vmatprep.subr.mxu0 0.0
    %669 = vmatpush1.msra.mxu0 0.0
    %670 = vmatprep.subr.mxu0 0.0
    %671 = vmatpush1.msra.mxu0 0.0
    %672 = vmatprep.subr.mxu0 0.0
    %673 = vmatpush1.msra.mxu0 0.0
    %674 = vmatprep.subr.mxu0 0.0
    %675 = vmatpush1.msra.mxu0 0.0
    %676 = vmatprep.subr.mxu0 0.0
    %677 = vmatpush1.msra.mxu0 0.0
    %678 = vmatprep.subr.mxu0 0.0
    %679 = vmatpush1.msra.mxu0 0.0
    %680 = vmatprep.subr.mxu0 0.0
    %681 = vmatpush1.msra.mxu0 0.0
    %682 = vmatprep.subr.mxu0 0.0
    %683 = vmatpush1.msra.mxu0 0.0
    %684 = vmatprep.subr.mxu0 0.0
    %685 = vmatpush1.msra.mxu0 0.0
    %686 = vmatprep.subr.mxu0 0.0
    %687 = vmatpush1.msra.mxu0 0.0
    %688 = vmatprep.subr.mxu0 0.0
    %689 = vmatpush1.msra.mxu0 0.0
    %690 = vmatprep.subr.mxu0 0.0
    %691 = vmatpush1.msra.mxu0 0.0
    %692 = vmatprep.subr.mxu0 0.0
    %693 = vmatpush1.msra.mxu0 0.0
    %694 = vmatprep.subr.mxu0 0.0
    %695 = vmatpush1.msra.mxu0 0.0
    %696 = vmatprep.subr.mxu0 0.0
    %697 = vmatpush1.msra.mxu0 0.0
    %698 = vmatprep.subr.mxu0 0.0
    %699 = vmatpush1.msra.mxu0 0.0
    %700 = vmatprep.mubr.f32.mxu0 0.0
    %701 = vmatmul.mubr.f32.gmra.mrb[0].mxu0 %v604
    %v702 = vpop.f32.mrb[0].mxu0
    %v703 = vadd.f32 0.0, %v702
    %v704 = vpop.f32.mrb[0].mxu0
    %v705 = vadd.f32 0.0, %v704
    %706 = vmatprep.mubr.f32.mxu0 0.0
    %707 = vmatmul.mubr.f32.gmra.mrb[0].mxu0 %v606
    %v708 = vpop.f32.mrb[0].mxu0
    %v709 = vadd.f32 0.0, %v708
    %v710 = vpop.f32.mrb[0].mxu0
    %v711 = vadd.f32 0.0, %v710
    %712 = vmatprep.mubr.f32.mxu0 0.0
    %713 = vmatmul.mubr.f32.gmra.mrb[0].mxu0 %v608
    %v714 = vpop.f32.mrb[0].mxu0
    %v715 = vadd.f32 0.0, %v714
    %v716 = vpop.f32.mrb[0].mxu0
    %v717 = vadd.f32 0.0, %v716
    %718 = vmatprep.mubr.f32.mxu0 0.0
    %719 = vmatmul.mubr.f32.gmra.mrb[0].mxu0 %v610
    %v720 = vpop.f32.mrb[0].mxu0
    %v721 = vadd.f32 0.0, %v720
    %v722 = vpop.f32.mrb[0].mxu0
    %v723 = vadd.f32 0.0, %v722
    %724 = vmatprep.mubr.f32.mxu0 0.0
    %725 = vmatmul.mubr.f32.gmra.mrb[0].mxu0 %v612
    %v726 = vpop.f32.mrb[0].mxu0
    %v727 = vadd.f32 0.0, %v726
    %v728 = vpop.f32.mrb[0].mxu0
    %v729 = vadd.f32 0.0, %v728
    %730 = vmatprep.mubr.f32.mxu0 0.0
    %731 = vmatmul.mubr.f32.gmra.mrb[0].mxu0 %v614
    %v732 = vpop.f32.mrb[0].mxu0
    %v733 = vadd.f32 0.0, %v732
    %v734 = vpop.f32.mrb[0].mxu0
    %v735 = vadd.f32 0.0, %v734
    %736 = vmatprep.mubr.f32.mxu0 0.0
    %737 = vmatmul.mubr.f32.gmra.mrb[0].mxu0 %v616
    %v738 = vpop.f32.mrb[0].mxu0
    %v739 = vadd.f32 0.0, %v738
    %v740 = vpop.f32.mrb[0].mxu0
    %v741 = vadd.f32 0.0, %v740
    %742 = vmatprep.mubr.f32.mxu0 0.0
    %743 = vmatmul.mubr.f32.gmra.mrb[0].mxu0 %v618
    %v744 = vpop.f32.mrb[0].mxu0
    %v745 = vadd.f32 0.0, %v744
    %v746 = vpop.f32.mrb[0].mxu0
    %v747 = vadd.f32 0.0, %v746
    %748 = vmatprep.mubr.f32.mxu0 0.0
    %749 = vmatmul.mubr.f32.gmra.mrb[0].mxu0 %v620
    %v750 = vpop.f32.mrb[0].mxu0
    %v751 = vadd.f32 0.0, %v750
    %v752 = vpop.f32.mrb[0].mxu0
    %v753 = vadd.f32 0.0, %v752
    %754 = vmatprep.mubr.f32.mxu0 0.0
    %755 = vmatmul.mubr.f32.gmra.mrb[0].mxu0 %v622
    %v756 = vpop.f32.mrb[0].mxu0
    %v757 = vadd.f32 0.0, %v756
    %v758 = vpop.f32.mrb[0].mxu0
    %v759 = vadd.f32 0.0, %v758
    %760 = vmatprep.mubr.f32.mxu0 0.0
    %761 = vmatmul.mubr.f32.gmra.mrb[0].mxu0 %v624
    %v762 = vpop.f32.mrb[0].mxu0
    %v763 = vadd.f32 0.0, %v762
    %v764 = vpop.f32.mrb[0].mxu0
    %v765 = vadd.f32 0.0, %v764
    %766 = vmatprep.mubr.f32.mxu0 0.0
    %767 = vmatmul.mubr.f32.gmra.mrb[0].mxu0 %v626
    %v768 = vpop.f32.mrb[0].mxu0
    %v769 = vadd.f32 0.0, %v768
    %v770 = vpop.f32.mrb[0].mxu0
    %v771 = vadd.f32 0.0, %v770
    %772 = vmatprep.mubr.f32.mxu0 0.0
    %773 = vmatmul.mubr.f32.gmra.mrb[0].mxu0 %v628
    %v774 = vpop.f32.mrb[0].mxu0
    %v775 = vadd.f32 0.0, %v774
    %v776 = vpop.f32.mrb[0].mxu0
    %v777 = vadd.f32 0.0, %v776
    %778 = vmatprep.mubr.f32.mxu0 0.0
    %779 = vmatmul.mubr.f32.gmra.mrb[0].mxu0 %v630
    %v780 = vpop.f32.mrb[0].mxu0
    %v781 = vadd.f32 0.0, %v780
    %v782 = vpop.f32.mrb[0].mxu0
    %v783 = vadd.f32 0.0, %v782
    %784 = vmatprep.mubr.f32.mxu0 0.0
    %785 = vmatmul.mubr.f32.gmra.mrb[0].mxu0 %v632
    %v786 = vpop.f32.mrb[0].mxu0
    %v787 = vadd.f32 0.0, %v786
    %v788 = vpop.f32.mrb[0].mxu0
    %v789 = vadd.f32 0.0, %v788
    %790 = vmatprep.mubr.f32.mxu0 0.0
    %791 = vmatmul.mubr.f32.gmra.mrb[0].mxu0 %v634
    %v792 = vpop.f32.mrb[0].mxu0
    %v793 = vadd.f32 0.0, %v792
    %v794 = vpop.f32.mrb[0].mxu0
    %v795 = vadd.f32 0.0, %v794
    %796 = vdwg.mxu0
    %813 = vrot.lane.b32.xlu0 %v256, 32
    %v814 = vpop.permute.xlu0 %813
    %815 = vrot.lane.b32.xlu0 %v261, 32
    %v816 = vpop.permute.xlu0 %815
    %817 = vrot.lane.b32.xlu0 %v266, 32
    %v818 = vpop.permute.xlu0 %817
    %819 = vrot.lane.b32.xlu0 %v271, 32
    %v820 = vpop.permute.xlu0 %819
    %821 = vrot.lane.b32.xlu0 %v276, 32
    %v822 = vpop.permute.xlu0 %821
    %823 = vrot.lane.b32.xlu0 %v281, 32
    %v824 = vpop.permute.xlu0 %823
    %825 = vrot.lane.b32.xlu0 %v286, 32
    %v826 = vpop.permute.xlu0 %825
    %827 = vrot.lane.b32.xlu0 %v291, 32
    %v828 = vpop.permute.xlu0 %827
    %829 = vrot.lane.b32.xlu0 %v296, 32
    %v830 = vpop.permute.xlu0 %829
    %831 = vrot.lane.b32.xlu0 %v301, 32
    %v832 = vpop.permute.xlu0 %831
    %833 = vrot.lane.b32.xlu0 %v306, 32
    %v834 = vpop.permute.xlu0 %833
    %835 = vrot.lane.b32.xlu0 %v311, 32
    %v836 = vpop.permute.xlu0 %835
    %837 = vrot.lane.b32.xlu0 %v316, 32
    %v838 = vpop.permute.xlu0 %837
    %839 = vrot.lane.b32.xlu0 %v321, 32
    %v840 = vpop.permute.xlu0 %839
    %841 = vrot.lane.b32.xlu0 %v326, 32
    %v842 = vpop.permute.xlu0 %841
    %843 = vrot.lane.b32.xlu0 %v331, 32
    %v844 = vpop.permute.xlu0 %843
    %861 = vrot.lane.b32.xlu0 %v256, 64
    %v862 = vpop.permute.xlu0 %861
    %863 = vrot.lane.b32.xlu0 %v261, 64
    %v864 = vpop.permute.xlu0 %863
    %865 = vrot.lane.b32.xlu0 %v266, 64
    %v866 = vpop.permute.xlu0 %865
    %867 = vrot.lane.b32.xlu0 %v271, 64
    %v868 = vpop.permute.xlu0 %867
    %869 = vrot.lane.b32.xlu0 %v276, 64
    %v870 = vpop.permute.xlu0 %869
    %871 = vrot.lane.b32.xlu0 %v281, 64
    %v872 = vpop.permute.xlu0 %871
    %873 = vrot.lane.b32.xlu0 %v286, 64
    %v874 = vpop.permute.xlu0 %873
    %875 = vrot.lane.b32.xlu0 %v291, 64
    %v876 = vpop.permute.xlu0 %875
    %877 = vrot.lane.b32.xlu0 %v296, 64
    %v878 = vpop.permute.xlu0 %877
    %879 = vrot.lane.b32.xlu0 %v301, 64
    %v880 = vpop.permute.xlu0 %879
    %881 = vrot.lane.b32.xlu0 %v306, 64
    %v882 = vpop.permute.xlu0 %881
    %883 = vrot.lane.b32.xlu0 %v311, 64
    %v884 = vpop.permute.xlu0 %883
    %885 = vrot.lane.b32.xlu0 %v316, 64
    %v886 = vpop.permute.xlu0 %885
    %887 = vrot.lane.b32.xlu0 %v321, 64
    %v888 = vpop.permute.xlu0 %887
    %889 = vrot.lane.b32.xlu0 %v326, 64
    %v890 = vpop.permute.xlu0 %889
    %891 = vrot.lane.b32.xlu0 %v331, 64
    %v892 = vpop.permute.xlu0 %891
    %909 = vrot.lane.b32.xlu0 %v256, 96
    %v910 = vpop.permute.xlu0 %909
    %911 = vrot.lane.b32.xlu0 %v261, 96
    %v912 = vpop.permute.xlu0 %911
    %913 = vrot.lane.b32.xlu0 %v266, 96
    %v914 = vpop.permute.xlu0 %913
    %915 = vrot.lane.b32.xlu0 %v271, 96
    %v916 = vpop.permute.xlu0 %915
    %917 = vrot.lane.b32.xlu0 %v276, 96
    %v918 = vpop.permute.xlu0 %917
    %919 = vrot.lane.b32.xlu0 %v281, 96
    %v920 = vpop.permute.xlu0 %919
    %921 = vrot.lane.b32.xlu0 %v286, 96
    %v922 = vpop.permute.xlu0 %921
    %923 = vrot.lane.b32.xlu0 %v291, 96
    %v924 = vpop.permute.xlu0 %923
    %925 = vrot.lane.b32.xlu0 %v296, 96
    %v926 = vpop.permute.xlu0 %925
    %927 = vrot.lane.b32.xlu0 %v301, 96
    %v928 = vpop.permute.xlu0 %927
    %929 = vrot.lane.b32.xlu0 %v306, 96
    %v930 = vpop.permute.xlu0 %929
    %931 = vrot.lane.b32.xlu0 %v311, 96
    %v932 = vpop.permute.xlu0 %931
    %933 = vrot.lane.b32.xlu0 %v316, 96
    %v934 = vpop.permute.xlu0 %933
    %935 = vrot.lane.b32.xlu0 %v321, 96
    %v936 = vpop.permute.xlu0 %935
    %937 = vrot.lane.b32.xlu0 %v326, 96
    %v938 = vpop.permute.xlu0 %937
    %939 = vrot.lane.b32.xlu0 %v331, 96
    %v940 = vpop.permute.xlu0 %939
    %v957 = vsel %vm140, %v256, %v814
    %v958 = vsel %vm140, %v261, %v816
    %v959 = vsel %vm140, %v266, %v818
    %v960 = vsel %vm140, %v271, %v820
    %v961 = vsel %vm140, %v276, %v822
    %v962 = vsel %vm140, %v281, %v824
    %v963 = vsel %vm140, %v286, %v826
    %v964 = vsel %vm140, %v291, %v828
    %v965 = vsel %vm140, %v296, %v830
    %v966 = vsel %vm140, %v301, %v832
    %v967 = vsel %vm140, %v306, %v834
    %v968 = vsel %vm140, %v311, %v836
    %v969 = vsel %vm140, %v316, %v838
    %v970 = vsel %vm140, %v321, %v840
    %v971 = vsel %vm140, %v326, %v842
    %v972 = vsel %vm140, %v331, %v844
    %vm973 = vcmask 523264
    %v974 = vsel %vm973, %v957, %v862
    %v975 = vsel %vm973, %v958, %v864
    %v976 = vsel %vm973, %v959, %v866
    %v977 = vsel %vm973, %v960, %v868
    %v978 = vsel %vm973, %v961, %v870
    %v979 = vsel %vm973, %v962, %v872
    %v980 = vsel %vm973, %v963, %v874
    %v981 = vsel %vm973, %v964, %v876
    %v982 = vsel %vm973, %v965, %v878
    %v983 = vsel %vm973, %v966, %v880
    %v984 = vsel %vm973, %v967, %v882
    %v985 = vsel %vm973, %v968, %v884
    %v986 = vsel %vm973, %v969, %v886
    %v987 = vsel %vm973, %v970, %v888
    %v988 = vsel %vm973, %v971, %v890
    %v989 = vsel %vm973, %v972, %v892
    %vm990 = vcmask 785408
    %v991 = vsel %vm990, %v974, %v910
    %v992 = vsel %vm990, %v975, %v912
    %v993 = vsel %vm990, %v976, %v914
    %v994 = vsel %vm990, %v977, %v916
    %v995 = vsel %vm990, %v978, %v918
    %v996 = vsel %vm990, %v979, %v920
    %v997 = vsel %vm990, %v980, %v922
    %v998 = vsel %vm990, %v981, %v924
    %v999 = vsel %vm990, %v982, %v926
    %v1000 = vsel %vm990, %v983, %v928
    %v1001 = vsel %vm990, %v984, %v930
    %v1002 = vsel %vm990, %v985, %v932
    %v1003 = vsel %vm990, %v986, %v934
    %v1004 = vsel %vm990, %v987, %v936
    %v1005 = vsel %vm990, %v988, %v938
    %v1006 = vsel %vm990, %v989, %v940
    %v1007 = vmul.f32 %v703, %v991
    %v1008 = vmul.f32 %v705, %v991
    %v1009 = vmul.f32 %v709, %v992
    %v1010 = vmul.f32 %v711, %v992
    %v1011 = vmul.f32 %v715, %v993
    %v1012 = vmul.f32 %v717, %v993
    %v1013 = vmul.f32 %v721, %v994
    %v1014 = vmul.f32 %v723, %v994
    %v1015 = vmul.f32 %v727, %v995
    %v1016 = vmul.f32 %v729, %v995
    %v1017 = vmul.f32 %v733, %v996
    %v1018 = vmul.f32 %v735, %v996
    %v1019 = vmul.f32 %v739, %v997
    %v1020 = vmul.f32 %v741, %v997
    %v1021 = vmul.f32 %v745, %v998
    %v1022 = vmul.f32 %v747, %v998
    %v1023 = vmul.f32 %v751, %v999
    %v1024 = vmul.f32 %v753, %v999
    %v1025 = vmul.f32 %v757, %v1000
    %v1026 = vmul.f32 %v759, %v1000
    %v1027 = vmul.f32 %v763, %v1001
    %v1028 = vmul.f32 %v765, %v1001
    %v1029 = vmul.f32 %v769, %v1002
    %v1030 = vmul.f32 %v771, %v1002
    %v1031 = vmul.f32 %v775, %v1003
    %v1032 = vmul.f32 %v777, %v1003
    %v1033 = vmul.f32 %v781, %v1004
    %v1034 = vmul.f32 %v783, %v1004
    %v1035 = vmul.f32 %v787, %v1005
    %v1036 = vmul.f32 %v789, %v1005
    %v1037 = vmul.f32 %v793, %v1006
    %v1038 = vmul.f32 %v795, %v1006
    %v1039 = vadd.f32 %v1007, %v1009
    %v1040 = vrot.slane %v1039, 4
    %v1041 = vadd.f32 %v1039, %v1040
    %v1042 = vrot.slane %v1041, 2
    %v1043 = vadd.f32 %v1041, %v1042
    %v1044 = vrot.slane %v1043, 1
    %v1045 = vadd.f32 %v1043, %v1044
    %v1046 = vadd.f32 %v1008, %v1010
    %v1047 = vrot.slane %v1046, 4
    %v1048 = vadd.f32 %v1046, %v1047
    %v1049 = vrot.slane %v1048, 2
    %v1050 = vadd.f32 %v1048, %v1049
    %v1051 = vrot.slane %v1050, 1
    %v1052 = vadd.f32 %v1050, %v1051
    %v1053 = vadd.f32 %v1011, %v1013
    %v1054 = vrot.slane %v1053, 4
    %v1055 = vadd.f32 %v1053, %v1054
    %v1056 = vrot.slane %v1055, 2
    %v1057 = vadd.f32 %v1055, %v1056
    %v1058 = vrot.slane %v1057, 1
    %v1059 = vadd.f32 %v1057, %v1058
    %v1060 = vadd.f32 %v1012, %v1014
    %v1061 = vrot.slane %v1060, 4
    %v1062 = vadd.f32 %v1060, %v1061
    %v1063 = vrot.slane %v1062, 2
    %v1064 = vadd.f32 %v1062, %v1063
    %v1065 = vrot.slane %v1064, 1
    %v1066 = vadd.f32 %v1064, %v1065
    %v1067 = vadd.f32 %v1015, %v1017
    %v1068 = vrot.slane %v1067, 4
    %v1069 = vadd.f32 %v1067, %v1068
    %v1070 = vrot.slane %v1069, 2
    %v1071 = vadd.f32 %v1069, %v1070
    %v1072 = vrot.slane %v1071, 1
    %v1073 = vadd.f32 %v1071, %v1072
    %v1074 = vadd.f32 %v1016, %v1018
    %v1075 = vrot.slane %v1074, 4
    %v1076 = vadd.f32 %v1074, %v1075
    %v1077 = vrot.slane %v1076, 2
    %v1078 = vadd.f32 %v1076, %v1077
    %v1079 = vrot.slane %v1078, 1
    %v1080 = vadd.f32 %v1078, %v1079
    %v1081 = vadd.f32 %v1019, %v1021
    %v1082 = vrot.slane %v1081, 4
    %v1083 = vadd.f32 %v1081, %v1082
    %v1084 = vrot.slane %v1083, 2
    %v1085 = vadd.f32 %v1083, %v1084
    %v1086 = vrot.slane %v1085, 1
    %v1087 = vadd.f32 %v1085, %v1086
    %v1088 = vadd.f32 %v1020, %v1022
    %v1089 = vrot.slane %v1088, 4
    %v1090 = vadd.f32 %v1088, %v1089
    %v1091 = vrot.slane %v1090, 2
    %v1092 = vadd.f32 %v1090, %v1091
    %v1093 = vrot.slane %v1092, 1
    %v1094 = vadd.f32 %v1092, %v1093
    %v1095 = vadd.f32 %v1023, %v1025
    %v1096 = vrot.slane %v1095, 4
    %v1097 = vadd.f32 %v1095, %v1096
    %v1098 = vrot.slane %v1097, 2
    %v1099 = vadd.f32 %v1097, %v1098
    %v1100 = vrot.slane %v1099, 1
    %v1101 = vadd.f32 %v1099, %v1100
    %v1102 = vadd.f32 %v1024, %v1026
    %v1103 = vrot.slane %v1102, 4
    %v1104 = vadd.f32 %v1102, %v1103
    %v1105 = vrot.slane %v1104, 2
    %v1106 = vadd.f32 %v1104, %v1105
    %v1107 = vrot.slane %v1106, 1
    %v1108 = vadd.f32 %v1106, %v1107
    %v1109 = vadd.f32 %v1027, %v1029
    %v1110 = vrot.slane %v1109, 4
    %v1111 = vadd.f32 %v1109, %v1110
    %v1112 = vrot.slane %v1111, 2
    %v1113 = vadd.f32 %v1111, %v1112
    %v1114 = vrot.slane %v1113, 1
    %v1115 = vadd.f32 %v1113, %v1114
    %v1116 = vadd.f32 %v1028, %v1030
    %v1117 = vrot.slane %v1116, 4
    %v1118 = vadd.f32 %v1116, %v1117
    %v1119 = vrot.slane %v1118, 2
    %v1120 = vadd.f32 %v1118, %v1119
    %v1121 = vrot.slane %v1120, 1
    %v1122 = vadd.f32 %v1120, %v1121
    %v1123 = vadd.f32 %v1031, %v1033
    %v1124 = vrot.slane %v1123, 4
    %v1125 = vadd.f32 %v1123, %v1124
    %v1126 = vrot.slane %v1125, 2
    %v1127 = vadd.f32 %v1125, %v1126
    %v1128 = vrot.slane %v1127, 1
    %v1129 = vadd.f32 %v1127, %v1128
    %v1130 = vadd.f32 %v1032, %v1034
    %v1131 = vrot.slane %v1130, 4
    %v1132 = vadd.f32 %v1130, %v1131
    %v1133 = vrot.slane %v1132, 2
    %v1134 = vadd.f32 %v1132, %v1133
    %v1135 = vrot.slane %v1134, 1
    %v1136 = vadd.f32 %v1134, %v1135
    %v1137 = vadd.f32 %v1035, %v1037
    %v1138 = vrot.slane %v1137, 4
    %v1139 = vadd.f32 %v1137, %v1138
    %v1140 = vrot.slane %v1139, 2
    %v1141 = vadd.f32 %v1139, %v1140
    %v1142 = vrot.slane %v1141, 1
    %v1143 = vadd.f32 %v1141, %v1142
    %v1144 = vadd.f32 %v1036, %v1038
    %v1145 = vrot.slane %v1144, 4
    %v1146 = vadd.f32 %v1144, %v1145
    %v1147 = vrot.slane %v1146, 2
    %v1148 = vadd.f32 %v1146, %v1147
    %v1149 = vrot.slane %v1148, 1
    %v1150 = vadd.f32 %v1148, %v1149
    %v1151 = vld [vmem:[#allocation10] sm:$0xff]
    %v1152 = vld [vmem:[#allocation10 + $0x8] sm:$0xff]
    %v1153 = vld [vmem:[#allocation10 + $0x10] sm:$0xff]
    %v1154 = vld [vmem:[#allocation10 + $0x18] sm:$0xff]
    %v1155 = vld [vmem:[#allocation10 + $0x20] sm:$0xff]
    %v1156 = vld [vmem:[#allocation10 + $0x28] sm:$0xff]
    %v1157 = vld [vmem:[#allocation10 + $0x30] sm:$0xff]
    %v1158 = vld [vmem:[#allocation10 + $0x38] sm:$0xff]
    %v1159 = vld [vmem:[#allocation10 + $0x40] sm:$0xff]
    %v1160 = vld [vmem:[#allocation10 + $0x48] sm:$0xff]
    %v1161 = vld [vmem:[#allocation10 + $0x50] sm:$0xff]
    %v1162 = vld [vmem:[#allocation10 + $0x58] sm:$0xff]
    %v1163 = vld [vmem:[#allocation10 + $0x60] sm:$0xff]
    %v1164 = vld [vmem:[#allocation10 + $0x68] sm:$0xff]
    %v1165 = vld [vmem:[#allocation10 + $0x70] sm:$0xff]
    %v1166 = vld [vmem:[#allocation10 + $0x78] sm:$0xff]
    %v1167 = vld [vmem:[#allocation10 + $0x80] sm:$0xff]
    %v1168 = vld [vmem:[#allocation10 + $0x88] sm:$0xff]
    %v1169 = vld [vmem:[#allocation10 + $0x90] sm:$0xff]
    %v1170 = vld [vmem:[#allocation10 + $0x98] sm:$0xff]
    %v1171 = vld [vmem:[#allocation10 + $0xa0] sm:$0xff]
    %v1172 = vld [vmem:[#allocation10 + $0xa8] sm:$0xff]
    %v1173 = vld [vmem:[#allocation10 + $0xb0] sm:$0xff]
    %v1174 = vld [vmem:[#allocation10 + $0xb8] sm:$0xff]
    %v1175 = vld [vmem:[#allocation10 + $0xc0] sm:$0xff]
    %v1176 = vld [vmem:[#allocation10 + $0xc8] sm:$0xff]
    %v1177 = vld [vmem:[#allocation10 + $0xd0] sm:$0xff]
    %v1178 = vld [vmem:[#allocation10 + $0xd8] sm:$0xff]
    %v1179 = vld [vmem:[#allocation10 + $0xe0] sm:$0xff]
    %v1180 = vld [vmem:[#allocation10 + $0xe8] sm:$0xff]
    %v1181 = vld [vmem:[#allocation10 + $0xf0] sm:$0xff]
    %v1182 = vld [vmem:[#allocation10 + $0xf8] sm:$0xff]
    %v1183 = vld [vmem:[#allocation10 + $0x100] sm:$0xff]
    %v1184 = vld [vmem:[#allocation10 + $0x108] sm:$0xff]
    %v1185 = vld [vmem:[#allocation10 + $0x110] sm:$0xff]
    %v1186 = vld [vmem:[#allocation10 + $0x118] sm:$0xff]
    %v1187 = vld [vmem:[#allocation10 + $0x120] sm:$0xff]
    %v1188 = vld [vmem:[#allocation10 + $0x128] sm:$0xff]
    %v1189 = vld [vmem:[#allocation10 + $0x130] sm:$0xff]
    %v1190 = vld [vmem:[#allocation10 + $0x138] sm:$0xff]
    %v1191 = vld [vmem:[#allocation10 + $0x140] sm:$0xff]
    %v1192 = vld [vmem:[#allocation10 + $0x148] sm:$0xff]
    %v1193 = vld [vmem:[#allocation10 + $0x150] sm:$0xff]
    %v1194 = vld [vmem:[#allocation10 + $0x158] sm:$0xff]
    %v1195 = vld [vmem:[#allocation10 + $0x160] sm:$0xff]
    %v1196 = vld [vmem:[#allocation10 + $0x168] sm:$0xff]
    %v1197 = vld [vmem:[#allocation10 + $0x170] sm:$0xff]
    %v1198 = vld [vmem:[#allocation10 + $0x178] sm:$0xff]
    %v1199 = vld [vmem:[#allocation10 + $0x180] sm:$0xff]
    %v1200 = vld [vmem:[#allocation10 + $0x188] sm:$0xff]
    %v1201 = vld [vmem:[#allocation10 + $0x190] sm:$0xff]
    %v1202 = vld [vmem:[#allocation10 + $0x198] sm:$0xff]
    %v1203 = vld [vmem:[#allocation10 + $0x1a0] sm:$0xff]
    %v1204 = vld [vmem:[#allocation10 + $0x1a8] sm:$0xff]
    %v1205 = vld [vmem:[#allocation10 + $0x1b0] sm:$0xff]
    %v1206 = vld [vmem:[#allocation10 + $0x1b8] sm:$0xff]
    %v1207 = vld [vmem:[#allocation10 + $0x1c0] sm:$0xff]
    %v1208 = vld [vmem:[#allocation10 + $0x1c8] sm:$0xff]
    %v1209 = vld [vmem:[#allocation10 + $0x1d0] sm:$0xff]
    %v1210 = vld [vmem:[#allocation10 + $0x1d8] sm:$0xff]
    %v1211 = vld [vmem:[#allocation10 + $0x1e0] sm:$0xff]
    %v1212 = vld [vmem:[#allocation10 + $0x1e8] sm:$0xff]
    %v1213 = vld [vmem:[#allocation10 + $0x1f0] sm:$0xff]
    %v1214 = vld [vmem:[#allocation10 + $0x1f8] sm:$0xff]
    %v1215 = vld [vmem:[%s6] sm:$0x3]
    %v1217 = vlaneseq
    %v1218 = vshrl.u32 %v1217, 7
    %v1219 = vsub.s32 0, %v1218
    %v1220 = vrot.slane %v1215, %v1219
    %v1221 = vlaneseq
    %v1222 = vshrl.u32 %v1221, 7
    %v1223 = vsub.s32 1, %v1222
    %v1224 = vrot.slane %v1215, %v1223
    %vm1243 = vcmask 1041409
    %v1244 = vsel %vm1243, %v1059, %v1045
    %vm1245 = vcmask 1042434
    %v1246 = vsel %vm1245, %v1073, %v1244
    %vm1247 = vcmask 1043459
    %v1248 = vsel %vm1247, %v1087, %v1246
    %vm1249 = vcmask 1044484
    %v1250 = vsel %vm1249, %v1101, %v1248
    %vm1251 = vcmask 1045509
    %v1252 = vsel %vm1251, %v1115, %v1250
    %vm1253 = vcmask 1046534
    %v1254 = vsel %vm1253, %v1129, %v1252
    %vm1255 = vcmask 1047559
    %v1256 = vsel %vm1255, %v1143, %v1254
    %v1257 = vsel %vm1243, %v1066, %v1052
    %v1258 = vsel %vm1245, %v1080, %v1257
    %v1259 = vsel %vm1247, %v1094, %v1258
    %v1260 = vsel %vm1249, %v1108, %v1259
    %v1261 = vsel %vm1251, %v1122, %v1260
    %v1262 = vsel %vm1253, %v1136, %v1261
    %v1263 = vsel %vm1255, %v1150, %v1262
    %1266 = vmatprep.subr.mxu0 %v1152
    %1267 = vmatpush1.msra.mxu0 %v1151
    %1268 = vmatprep.subr.mxu0 %v1154
    %1269 = vmatpush1.msra.mxu0 %v1153
    %1270 = vmatprep.subr.mxu0 %v1156
    %1271 = vmatpush1.msra.mxu0 %v1155
    %1272 = vmatprep.subr.mxu0 %v1158
    %1273 = vmatpush1.msra.mxu0 %v1157
    %1274 = vmatprep.subr.mxu0 %v1160
    %1275 = vmatpush1.msra.mxu0 %v1159
    %1276 = vmatprep.subr.mxu0 %v1162
    %1277 = vmatpush1.msra.mxu0 %v1161
    %1278 = vmatprep.subr.mxu0 %v1164
    %1279 = vmatpush1.msra.mxu0 %v1163
    %1280 = vmatprep.subr.mxu0 %v1166
    %1281 = vmatpush1.msra.mxu0 %v1165
    %1282 = vmatprep.subr.mxu0 %v1168
    %1283 = vmatpush1.msra.mxu0 %v1167
    %1284 = vmatprep.subr.mxu0 %v1170
    %1285 = vmatpush1.msra.mxu0 %v1169
    %1286 = vmatprep.subr.mxu0 %v1172
    %1287 = vmatpush1.msra.mxu0 %v1171
    %1288 = vmatprep.subr.mxu0 %v1174
    %1289 = vmatpush1.msra.mxu0 %v1173
    %1290 = vmatprep.subr.mxu0 %v1176
    %1291 = vmatpush1.msra.mxu0 %v1175
    %1292 = vmatprep.subr.mxu0 %v1178
    %1293 = vmatpush1.msra.mxu0 %v1177
    %1294 = vmatprep.subr.mxu0 %v1180
    %1295 = vmatpush1.msra.mxu0 %v1179
    %1296 = vmatprep.subr.mxu0 %v1182
    %1297 = vmatpush1.msra.mxu0 %v1181
    %1298 = vmatprep.subr.mxu0 %v1184
    %1299 = vmatpush1.msra.mxu0 %v1183
    %1300 = vmatprep.subr.mxu0 %v1186
    %1301 = vmatpush1.msra.mxu0 %v1185
    %1302 = vmatprep.subr.mxu0 %v1188
    %1303 = vmatpush1.msra.mxu0 %v1187
    %1304 = vmatprep.subr.mxu0 %v1190
    %1305 = vmatpush1.msra.mxu0 %v1189
    %1306 = vmatprep.subr.mxu0 %v1192
    %1307 = vmatpush1.msra.mxu0 %v1191
    %1308 = vmatprep.subr.mxu0 %v1194
    %1309 = vmatpush1.msra.mxu0 %v1193
    %1310 = vmatprep.subr.mxu0 %v1196
    %1311 = vmatpush1.msra.mxu0 %v1195
    %1312 = vmatprep.subr.mxu0 %v1198
    %1313 = vmatpush1.msra.mxu0 %v1197
    %1314 = vmatprep.subr.mxu0 %v1200
    %1315 = vmatpush1.msra.mxu0 %v1199
    %1316 = vmatprep.subr.mxu0 %v1202
    %1317 = vmatpush1.msra.mxu0 %v1201
    %1318 = vmatprep.subr.mxu0 %v1204
    %1319 = vmatpush1.msra.mxu0 %v1203
    %1320 = vmatprep.subr.mxu0 %v1206
    %1321 = vmatpush1.msra.mxu0 %v1205
    %1322 = vmatprep.subr.mxu0 %v1208
    %1323 = vmatpush1.msra.mxu0 %v1207
    %1324 = vmatprep.subr.mxu0 %v1210
    %1325 = vmatpush1.msra.mxu0 %v1209
    %1326 = vmatprep.subr.mxu0 %v1212
    %1327 = vmatpush1.msra.mxu0 %v1211
    %1328 = vmatprep.subr.mxu0 %v1214
    %1329 = vmatpush1.msra.mxu0 %v1213
    %1330 = vmatprep.mubr.f32.mxu0 %v1263
    %1331 = vmatmul.mubr.f32.gmra.mrb[0].mxu0 %v1256
    %v1332 = vpop.f32.mrb[0].mxu0
    %v1333 = vadd.f32 %v1220, %v1332
    %v1334 = vpop.f32.mrb[0].mxu0
    %v1335 = vadd.f32 %v1224, %v1334
    %1336 = vdwg.mxu0
    %1337 = vst [vmem:[#allocation11] sm:$0xff] %v1333
    %1338 = vst [vmem:[#allocation11 + $0x8] sm:$0xff] %v1335
    // Predicated region
    $region50: #{tpu_custom_call.1} parent=1 // pred_check
      _
    $region51: #{tpu_custom_call.1} parent=1 // pred_check_branch
      %1340 = sbr.rel (0) target = $region53
    $region52: #{tpu_custom_call.1} parent=1 // pred_region
      %s1342 = ssub.s32 256, 256
      %1343 = vsyncadd [#allocation4], %s1342
      %s1345 = sshll.u32 [#allocation11], 4
      %s1346 = int_to_ptr.vmem [resolvable:$true] %s1345
      %1348 = dma.vmem_to_hbm [thread:$0]  %s1346, 256, %s7, [#allocation4]
    $region53: #{tpu_custom_call.1} parent=1 // pred_fallthru
      _
    // Predicated region
    $region54: #{tpu_custom_call.1} parent=1 // pred_check
      _
    $region55: #{tpu_custom_call.1} parent=1 // pred_check_branch
      %1350 = sbr.rel (0) target = $region57
    $region56: #{tpu_custom_call.1} parent=1 // pred_region
      %1351 = dma.done [#allocation4], 256
    $region57: #{tpu_custom_call.1} parent=1 // pred_fallthru
      _
    %1352 = vsyncpa [#allocation3], 1
    %1353 = vsyncpa [#allocation6], 1
    %1354 = vsyncpa [#allocation9], 1
    %1355 = vsyncpa [#allocation4], 1

</llo_original>
